<compile_context>
chip_gen: v7x
topology: tpu7x:2x2x1
jax: 0.10.0
libtpu: 0.0.40
codegen_flags: <defaults>
</compile_context>

<pallas_src>
import functools

import jax
import jax.numpy as jnp
from jax.experimental import pallas as pl
from jax.experimental.pallas import tpu as pltpu

_LANES = 128  # lane width


@functools.lru_cache(maxsize=None)
def _num_tensorcores():
    """Best-effort TensorCores-per-chip query; falls back to 2 (harmless:
    the split axis is capped by num_blocks and fully masked when duplicated)."""
    try:
        info = pltpu.get_tpu_info()
        for name in ("num_cores", "tensor_cores_per_chip", "cores_per_chip",
                     "num_tensorcores", "core_count"):
            v = getattr(info, name, None)
            if v is None:
                continue
            v = int(v)
            if 1 <= v <= 16:
                return v
    except Exception:
        pass
    return 2


def _round_up(x, m):
    return ((x + m - 1) // m) * m


def _loss_kernel(pred_ref, targ_ref, out_ref,
                 acc_base, acc_pen, acc_cnt,
                 *, valid_rows, blocks_per_split, use_mae):
    c = pl.program_id(0)   # split index (maps to a TensorCore on megacore chips)
    i = pl.program_id(1)   # block index within this split

    @pl.when(i == 0)
    def _init():
        acc_base[...] = jnp.zeros_like(acc_base)
        acc_pen[...] = jnp.zeros_like(acc_pen)
        acc_cnt[...] = jnp.zeros_like(acc_cnt)

    block_rows, lanes = pred_ref.shape
    groups = block_rows // 8           # block_rows is always a multiple of 8 (wrapper)
    logical_block = c * blocks_per_split + i
    rows_left = valid_rows - logical_block * block_rows   # may be <= 0 for clamped dup blocks

    # Native-dtype load, f32 compute/accumulate.
    p = pred_ref[...].astype(jnp.float32)
    t = targ_ref[...].astype(jnp.float32)
    diff = p - t
    adiff = jnp.abs(diff)
    base_elem = adiff if use_mae else diff * diff
    lower = p < t
    zero = jnp.float32(0.0)
    one = jnp.float32(1.0)

    def _tree(x):
        # (block_rows,128) -> (8,128): splits the sublane axis only (no (8,128)
        # tile boundary crossed), reduces over the leading axis with plain VALU
        # adds -> the small accumulators see one RMW per quantity per step.
        if groups == 1:
            return x
        return jnp.sum(x.reshape(groups, 8, lanes), axis=0)

    @pl.when(rows_left >= block_rows)
    def _fast():
        # Fully-valid interior block: no iota, no row mask.
        acc_base[...] += _tree(base_elem)
        acc_pen[...] += _tree(jnp.where(lower, adiff, zero))
        acc_cnt[...] += _tree(jnp.where(lower, one, zero))

    @pl.when(rows_left < block_rows)
    def _ragged():
        # Ragged last block / clamped duplicate block: mask invalid rows BEFORE
        # any add so Pallas block-padding garbage never enters a sum.
        row_ids = jax.lax.broadcasted_iota(jnp.int32, (block_rows, lanes), 0)
        valid = row_ids < rows_left
        lower_v = jnp.logical_and(valid, lower)
        acc_base[...] += _tree(jnp.where(valid, base_elem, zero))
        acc_pen[...] += _tree(jnp.where(lower_v, adiff, zero))
        acc_cnt[...] += _tree(jnp.where(lower_v, one, zero))

    # One cheap cross-lane reduction per split, only on the last step.
    @pl.when(i == pl.num_programs(1) - 1)
    def _finalize():
        out_ref[0, 0] = jnp.sum(acc_base[...])
        out_ref[0, 1] = jnp.sum(acc_pen[...])
        out_ref[0, 2] = jnp.sum(acc_cnt[...])


@functools.partial(jax.jit, static_argnames=("use_mae", "block_rows"))
def _penalized_loss_impl(pred, targ, penalty_factor, use_mae, block_rows):
    pred = pred.reshape(-1)
    targ = targ.reshape(-1)
    n = pred.shape[0]

    # Pad only the ragged lane tail (no-op for 128-aligned sizes). Padded
    # pred == targ == 0 contribute nothing to any term.
    # TODO(synk): for very large lane-misaligned inputs this pad is an extra
    # HBM copy; an in-kernel lane mask on the final block would remove it.
    rem = n % _LANES
    if rem:
        pad = _LANES - rem
        pred = jnp.pad(pred, (0, pad))
        targ = jnp.pad(targ, (0, pad))
    rows = pred.shape[0] // _LANES

    # Dtype-aware block sizing: ~512 KiB per input per pipeline buffer.
    if block_rows is None:
        itemsize = jnp.dtype(pred.dtype).itemsize
        block_rows = {1: 4096, 2: 2048}.get(itemsize, 1024)
    block_rows = max(8, (int(block_rows) // 8) * 8)

    if rows <= block_rows:
        # Single full-extent block. Round rows up to a multiple of 8 so the
        # in-kernel (groups, 8, 128) tree reduction is well-formed; the extra
        # zero rows contribute 0 to every term (pred == targ == 0).
        rows8 = _round_up(rows, 8)
        pred2 = pred.reshape(rows, _LANES)
        targ2 = targ.reshape(rows, _LANES)
        if rows8 != rows:
            pred2 = jnp.pad(pred2, ((0, rows8 - rows), (0, 0)))
            targ2 = jnp.pad(targ2, ((0, rows8 - rows), (0, 0)))
        rows = rows8
        block_rows = rows8
    else:
        pred2 = pred.reshape(rows, _LANES)   # contiguous reshape: no data movement
        targ2 = targ.reshape(rows, _LANES)

    num_blocks = pl.cdiv(rows, block_rows)
    num_splits = max(1, min(_num_tensorcores(), num_blocks))
    blocks_per_split = pl.cdiv(num_blocks, num_splits)

    def in_map(c, i):
        # Clamp so the DMA never targets a fully out-of-range block; the kernel
        # masks duplicated / ragged-block rows via rows_left.
        return (jnp.minimum(c * blocks_per_split + i, num_blocks - 1), 0)

    kernel = functools.partial(
        _loss_kernel,
        valid_rows=rows,
        blocks_per_split=blocks_per_split,
        use_mae=bool(use_mae),
    )

    partial_sums = pl.pallas_call(
        kernel,
        out_shape=jax.ShapeDtypeStruct((num_splits, 3), jnp.float32),
        grid_spec=pltpu.PrefetchScalarGridSpec(
            num_scalar_prefetch=0,
            grid=(num_splits, blocks_per_split),
            in_specs=[
                pl.BlockSpec((block_rows, _LANES), in_map),
                pl.BlockSpec((block_rows, _LANES), in_map),
            ],
            out_specs=pl.BlockSpec((1, 3), lambda c, i: (c, 0),
                                   memory_space=pltpu.SMEM),
            scratch_shapes=[
                pltpu.VMEM((8, _LANES), jnp.float32),   # base-loss partial sums
                pltpu.VMEM((8, _LANES), jnp.float32),   # penalized |diff| partial sums
                pltpu.VMEM((8, _LANES), jnp.float32),   # penalized-mask counts
            ],
        ),
        compiler_params=pltpu.CompilerParams(
            dimension_semantics=("parallel", "arbitrary"),
        ),
    )(pred2, targ2)

    sums = jnp.sum(partial_sums, axis=0)
    base = sums[0] / jnp.float32(n)
    pen = sums[1] / sums[2]   # NaN when no element has pred < targ (matches torch.mean([]))
    return base + jnp.asarray(penalty_factor, jnp.float32) * pen


def penalized_lower_prediction_loss(predictions, targets, penalty_factor=3.0,
                                    use_mae=True, block_rows=None):
    pred = jnp.asarray(predictions)
    targ = jnp.asarray(targets)
    return _penalized_loss_impl(pred, targ, jnp.float32(penalty_factor),
                                use_mae=bool(use_mae), block_rows=block_rows)


def _reference(pred, targ, penalty_factor=3.0, use_mae=True):
    p = jnp.asarray(pred, jnp.float32).reshape(-1)
    t = jnp.asarray(targ, jnp.float32).reshape(-1)
    diff = p - t
    base = jnp.mean(jnp.abs(diff)) if use_mae else jnp.mean(diff * diff)
    mask = p < t
    pen = jnp.sum(jnp.where(mask, jnp.abs(diff), 0.0)) / jnp.sum(mask)
    return base + penalty_factor * pen


if __name__ == "__main__":
    penalty_factor = 3.0

    # Case 1: tensors from the module's source (ragged length-4 -> lane-pad path).
    predictions = jnp.array([7.0, 8.5, 9.0, 5.0], jnp.float32)
    targets = jnp.array([8.0, 8.0, 8.0, 8.0], jnp.float32)
    loss1 = penalized_lower_prediction_loss(predictions, targets,
                                            penalty_factor=penalty_factor)
    jax.block_until_ready(loss1)
    # expected: base = 5.5/4 = 1.375 ; penalty = mean(1, 3) = 2 ; total = 7.375
    assert abs(float(loss1) - 7.375) < 1e-5, float(loss1)

    # Case 2: image-like NCHW batch, f32 (single full-extent block, fast path).
    key = jax.random.PRNGKey(0)
    kp, kt = jax.random.split(key)
    pred_img = jax.random.normal(kp, (2, 4, 16, 16), jnp.float32)
    targ_img = jax.random.normal(kt, (2, 4, 16, 16), jnp.float32)
    loss2 = penalized_lower_prediction_loss(pred_img, targ_img,
                                            penalty_factor=penalty_factor)
    jax.block_until_ready(loss2)
    ref2 = _reference(pred_img, targ_img, penalty_factor=penalty_factor)
    assert abs(float(loss2) - float(ref2)) < 1e-4, (float(loss2), float(ref2))

    # Case 3: bf16 inputs (native-dtype load, f32 accumulate) with MSE base term.
    pred_bf = pred_img.astype(jnp.bfloat16)
    targ_bf = targ_img.astype(jnp.bfloat16)
    loss3 = penalized_lower_prediction_loss(pred_bf, targ_bf,
                                            penalty_factor=penalty_factor,
                                            use_mae=False)
    jax.block_until_ready(loss3)
    ref3 = _reference(pred_bf, targ_bf, penalty_factor=penalty_factor, use_mae=False)
    assert abs(float(loss3) - float(ref3)) < 1e-3, (float(loss3), float(ref3))

    # Case 4: multi-block path with an odd block count (exercises fast path for
    # interior blocks + ragged/clamped-duplicate block masking) via a small
    # block override.
    kp2, kt2 = jax.random.split(jax.random.PRNGKey(1))
    pred_s = jax.random.normal(kp2, (19, 128), jnp.float32)
    targ_s = jax.random.normal(kt2, (19, 128), jnp.float32)
    loss4 = penalized_lower_prediction_loss(pred_s, targ_s,
                                            penalty_factor=penalty_factor,
                                            block_rows=8)
    jax.block_until_ready(loss4)
    ref4 = _reference(pred_s, targ_s, penalty_factor=penalty_factor)
    assert abs(float(loss4) - float(ref4)) < 1e-4, (float(loss4), float(ref4))

    print("KERNEL_OK")
</pallas_src>

<mosaic_0001>
module attributes {stable_mosaic.version = 11 : i64} {
  func.func @_loss_kernel(%arg0: i32, %arg1: i32, %arg2: memref<8x128xf32, #tpu.memory_space<vmem>>, %arg3: memref<8x128xf32, #tpu.memory_space<vmem>>, %arg4: memref<1x3xf32, #tpu.memory_space<smem>>, %arg5: memref<8x128xf32, #tpu.memory_space<vmem>>, %arg6: memref<8x128xf32, #tpu.memory_space<vmem>>, %arg7: memref<8x128xf32, #tpu.memory_space<vmem>>) attributes {dimension_semantics = [#tpu.dimension_semantics<parallel>, #tpu.dimension_semantics<arbitrary>], iteration_bounds = array<i64: 1, 1>, scalar_prefetch = 0 : i64, scratch_operands = 3 : i64, tpu.core_type = #tpu.core_type<tc>, window_params = [{transform_indices = @transform_0, window_bounds = array<i64: 8, 128>}, {transform_indices = @transform_1, window_bounds = array<i64: 8, 128>}, {transform_indices = @transform_2, window_bounds = array<i64: 1, 3>}]} {
    %c0_i32 = arith.constant 0 : i32
    %0 = arith.cmpi eq, %arg1, %c0_i32 : i32
    %1 = arith.extui %0 : i1 to i32
    %c0_i32_0 = arith.constant 0 : i32
    %2 = arith.cmpi ne, %1, %c0_i32_0 : i32
    scf.if %2 {
      %cst_14 = arith.constant 0.000000e+00 : f32
      %21 = vector.broadcast %cst_14 : f32 to vector<8x128xf32>
      %c0_15 = arith.constant 0 : index
      %c0_16 = arith.constant 0 : index
      %22 = vector.load %arg5[%c0_15, %c0_16] : memref<8x128xf32, #tpu.memory_space<vmem>>, vector<8x128xf32>
      tpu.vector_store %arg5[%c0_15, %c0_16], %21 {strides = array<i32>} : memref<8x128xf32, #tpu.memory_space<vmem>>, vector<8x128xf32>,
      %cst_17 = arith.constant 0.000000e+00 : f32
      %23 = vector.broadcast %cst_17 : f32 to vector<8x128xf32>
      %c0_18 = arith.constant 0 : index
      %c0_19 = arith.constant 0 : index
      %24 = vector.load %arg6[%c0_18, %c0_19] : memref<8x128xf32, #tpu.memory_space<vmem>>, vector<8x128xf32>
      tpu.vector_store %arg6[%c0_18, %c0_19], %23 {strides = array<i32>} : memref<8x128xf32, #tpu.memory_space<vmem>>, vector<8x128xf32>,
      %cst_20 = arith.constant 0.000000e+00 : f32
      %25 = vector.broadcast %cst_20 : f32 to vector<8x128xf32>
      %c0_21 = arith.constant 0 : index
      %c0_22 = arith.constant 0 : index
      %26 = vector.load %arg7[%c0_21, %c0_22] : memref<8x128xf32, #tpu.memory_space<vmem>>, vector<8x128xf32>
      tpu.vector_store %arg7[%c0_21, %c0_22], %25 {strides = array<i32>} : memref<8x128xf32, #tpu.memory_space<vmem>>, vector<8x128xf32>,
    } else {
    }
    %c1_i32 = arith.constant 1 : i32
    %3 = arith.muli %arg0, %c1_i32 : i32
    %4 = arith.addi %3, %arg1 : i32
    %c8_i32 = arith.constant 8 : i32
    %5 = arith.muli %4, %c8_i32 : i32
    %c8_i32_1 = arith.constant 8 : i32
    %6 = arith.subi %c8_i32_1, %5 : i32
    %c0 = arith.constant 0 : index
    %c0_2 = arith.constant 0 : index
    %7 = vector.load %arg2[%c0, %c0_2] : memref<8x128xf32, #tpu.memory_space<vmem>>, vector<8x128xf32>
    %c0_3 = arith.constant 0 : index
    %c0_4 = arith.constant 0 : index
    %8 = vector.load %arg3[%c0_3, %c0_4] : memref<8x128xf32, #tpu.memory_space<vmem>>, vector<8x128xf32>
    %9 = arith.subf %7, %8 : vector<8x128xf32>
    %10 = math.absf %9 : vector<8x128xf32>
    %11 = arith.cmpf olt, %7, %8 : vector<8x128xf32>
    %c8_i32_5 = arith.constant 8 : i32
    %12 = arith.cmpi sge, %6, %c8_i32_5 : i32
    %13 = arith.extui %12 : i1 to i32
    %cst = arith.constant 0.000000e+00 : f32
    %cst_6 = arith.constant 1.000000e+00 : f32
    %c0_i32_7 = arith.constant 0 : i32
    %14 = arith.cmpi ne, %13, %c0_i32_7 : i32
    scf.if %14 {
      %c0_14 = arith.constant 0 : index
      %c0_15 = arith.constant 0 : index
      %21 = vector.load %arg5[%c0_14, %c0_15] : memref<8x128xf32, #tpu.memory_space<vmem>>, vector<8x128xf32>
      %22 = arith.addf %21, %10 : vector<8x128xf32>
      %c0_16 = arith.constant 0 : index
      %c0_17 = arith.constant 0 : index
      %23 = vector.load %arg5[%c0_16, %c0_17] : memref<8x128xf32, #tpu.memory_space<vmem>>, vector<8x128xf32>
      tpu.vector_store %arg5[%c0_16, %c0_17], %22 {strides = array<i32>} : memref<8x128xf32, #tpu.memory_space<vmem>>, vector<8x128xf32>,
      %c0_18 = arith.constant 0 : index
      %c0_19 = arith.constant 0 : index
      %24 = vector.load %arg6[%c0_18, %c0_19] : memref<8x128xf32, #tpu.memory_space<vmem>>, vector<8x128xf32>
      %25 = vector.broadcast %cst : f32 to vector<8x128xf32>
      %26 = arith.select %11, %10, %25 : vector<8x128xi1>, vector<8x128xf32>
      %27 = arith.addf %24, %26 : vector<8x128xf32>
      %c0_20 = arith.constant 0 : index
      %c0_21 = arith.constant 0 : index
      %28 = vector.load %arg6[%c0_20, %c0_21] : memref<8x128xf32, #tpu.memory_space<vmem>>, vector<8x128xf32>
      tpu.vector_store %arg6[%c0_20, %c0_21], %27 {strides = array<i32>} : memref<8x128xf32, #tpu.memory_space<vmem>>, vector<8x128xf32>,
      %c0_22 = arith.constant 0 : index
      %c0_23 = arith.constant 0 : index
      %29 = vector.load %arg7[%c0_22, %c0_23] : memref<8x128xf32, #tpu.memory_space<vmem>>, vector<8x128xf32>
      %30 = vector.broadcast %cst_6 : f32 to vector<8x128xf32>
      %31 = vector.broadcast %cst : f32 to vector<8x128xf32>
      %32 = arith.select %11, %30, %31 : vector<8x128xi1>, vector<8x128xf32>
      %33 = arith.addf %29, %32 : vector<8x128xf32>
      %c0_24 = arith.constant 0 : index
      %c0_25 = arith.constant 0 : index
      %34 = vector.load %arg7[%c0_24, %c0_25] : memref<8x128xf32, #tpu.memory_space<vmem>>, vector<8x128xf32>
      tpu.vector_store %arg7[%c0_24, %c0_25], %33 {strides = array<i32>} : memref<8x128xf32, #tpu.memory_space<vmem>>, vector<8x128xf32>,
    } else {
    }
    %c8_i32_8 = arith.constant 8 : i32
    %15 = arith.cmpi slt, %6, %c8_i32_8 : i32
    %16 = arith.extui %15 : i1 to i32
    %cst_9 = arith.constant 0.000000e+00 : f32
    %cst_10 = arith.constant 1.000000e+00 : f32
    %c0_i32_11 = arith.constant 0 : i32
    %17 = arith.cmpi ne, %16, %c0_i32_11 : i32
    scf.if %17 {
      %21 = tpu.iota {dimensions = array<i32: 0>} : vector<8x128xi32>
      %22 = vector.broadcast %6 : i32 to vector<8x128xi32>
      %23 = arith.cmpi slt, %21, %22 : vector<8x128xi32>
      %24 = arith.andi %23, %11 : vector<8x128xi1>
      %c0_14 = arith.constant 0 : index
      %c0_15 = arith.constant 0 : index
      %25 = vector.load %arg5[%c0_14, %c0_15] : memref<8x128xf32, #tpu.memory_space<vmem>>, vector<8x128xf32>
      %26 = vector.broadcast %cst_9 : f32 to vector<8x128xf32>
      %27 = arith.select %23, %10, %26 : vector<8x128xi1>, vector<8x128xf32>
      %28 = arith.addf %25, %27 : vector<8x128xf32>
      %c0_16 = arith.constant 0 : index
      %c0_17 = arith.constant 0 : index
      %29 = vector.load %arg5[%c0_16, %c0_17] : memref<8x128xf32, #tpu.memory_space<vmem>>, vector<8x128xf32>
      tpu.vector_store %arg5[%c0_16, %c0_17], %28 {strides = array<i32>} : memref<8x128xf32, #tpu.memory_space<vmem>>, vector<8x128xf32>,
      %c0_18 = arith.constant 0 : index
      %c0_19 = arith.constant 0 : index
      %30 = vector.load %arg6[%c0_18, %c0_19] : memref<8x128xf32, #tpu.memory_space<vmem>>, vector<8x128xf32>
      %31 = vector.broadcast %cst_9 : f32 to vector<8x128xf32>
      %32 = arith.select %24, %10, %31 : vector<8x128xi1>, vector<8x128xf32>
      %33 = arith.addf %30, %32 : vector<8x128xf32>
      %c0_20 = arith.constant 0 : index
      %c0_21 = arith.constant 0 : index
      %34 = vector.load %arg6[%c0_20, %c0_21] : memref<8x128xf32, #tpu.memory_space<vmem>>, vector<8x128xf32>
      tpu.vector_store %arg6[%c0_20, %c0_21], %33 {strides = array<i32>} : memref<8x128xf32, #tpu.memory_space<vmem>>, vector<8x128xf32>,
      %c0_22 = arith.constant 0 : index
      %c0_23 = arith.constant 0 : index
      %35 = vector.load %arg7[%c0_22, %c0_23] : memref<8x128xf32, #tpu.memory_space<vmem>>, vector<8x128xf32>
      %36 = vector.broadcast %cst_10 : f32 to vector<8x128xf32>
      %37 = vector.broadcast %cst_9 : f32 to vector<8x128xf32>
      %38 = arith.select %24, %36, %37 : vector<8x128xi1>, vector<8x128xf32>
      %39 = arith.addf %35, %38 : vector<8x128xf32>
      %c0_24 = arith.constant 0 : index
      %c0_25 = arith.constant 0 : index
      %40 = vector.load %arg7[%c0_24, %c0_25] : memref<8x128xf32, #tpu.memory_space<vmem>>, vector<8x128xf32>
      tpu.vector_store %arg7[%c0_24, %c0_25], %39 {strides = array<i32>} : memref<8x128xf32, #tpu.memory_space<vmem>>, vector<8x128xf32>,
    } else {
    }
    %c0_i32_12 = arith.constant 0 : i32
    %18 = arith.cmpi eq, %arg1, %c0_i32_12 : i32
    %19 = arith.extui %18 : i1 to i32
    %c0_i32_13 = arith.constant 0 : i32
    %20 = arith.cmpi ne, %19, %c0_i32_13 : i32
    scf.if %20 {
      %c0_14 = arith.constant 0 : index
      %c0_15 = arith.constant 0 : index
      %21 = vector.load %arg5[%c0_14, %c0_15] : memref<8x128xf32, #tpu.memory_space<vmem>>, vector<8x128xf32>
      %22 = vector.shape_cast %21 : vector<8x128xf32> to vector<1x8x128xf32>
      %cst_16 = arith.constant dense<0.000000e+00> : vector<1xf32>
      %23 = vector.multi_reduction <add>, %22, %cst_16 [1, 2] : vector<1x8x128xf32> to vector<1xf32>
      %24 = vector.shape_cast %23 : vector<1xf32> to vector<1x1x1xf32>
      %25 = vector.extract %24[0, 0, 0] : f32 from vector<1x1x1xf32>
      %c0_17 = arith.constant 0 : index
      %c0_18 = arith.constant 0 : index
      %26 = memref.load %arg4[%c0_17, %c0_18] : memref<1x3xf32, #tpu.memory_space<smem>>
      memref.store %25, %arg4[%c0_17, %c0_18] : memref<1x3xf32, #tpu.memory_space<smem>>
      %c0_19 = arith.constant 0 : index
      %c0_20 = arith.constant 0 : index
      %27 = vector.load %arg6[%c0_19, %c0_20] : memref<8x128xf32, #tpu.memory_space<vmem>>, vector<8x128xf32>
      %28 = vector.shape_cast %27 : vector<8x128xf32> to vector<1x8x128xf32>
      %cst_21 = arith.constant dense<0.000000e+00> : vector<1xf32>
      %29 = vector.multi_reduction <add>, %28, %cst_21 [1, 2] : vector<1x8x128xf32> to vector<1xf32>
      %30 = vector.shape_cast %29 : vector<1xf32> to vector<1x1x1xf32>
      %31 = vector.extract %30[0, 0, 0] : f32 from vector<1x1x1xf32>
      %c0_22 = arith.constant 0 : index
      %c1 = arith.constant 1 : index
      %32 = memref.load %arg4[%c0_22, %c1] : memref<1x3xf32, #tpu.memory_space<smem>>
      memref.store %31, %arg4[%c0_22, %c1] : memref<1x3xf32, #tpu.memory_space<smem>>
      %c0_23 = arith.constant 0 : index
      %c0_24 = arith.constant 0 : index
      %33 = vector.load %arg7[%c0_23, %c0_24] : memref<8x128xf32, #tpu.memory_space<vmem>>, vector<8x128xf32>
      %34 = vector.shape_cast %33 : vector<8x128xf32> to vector<1x8x128xf32>
      %cst_25 = arith.constant dense<0.000000e+00> : vector<1xf32>
      %35 = vector.multi_reduction <add>, %34, %cst_25 [1, 2] : vector<1x8x128xf32> to vector<1xf32>
      %36 = vector.shape_cast %35 : vector<1xf32> to vector<1x1x1xf32>
      %37 = vector.extract %36[0, 0, 0] : f32 from vector<1x1x1xf32>
      %c0_26 = arith.constant 0 : index
      %c2 = arith.constant 2 : index
      %38 = memref.load %arg4[%c0_26, %c2] : memref<1x3xf32, #tpu.memory_space<smem>>
      memref.store %37, %arg4[%c0_26, %c2] : memref<1x3xf32, #tpu.memory_space<smem>>
    } else {
    }
    return
  }
  func.func @transform_0(%arg0: i32, %arg1: i32) -> (i32, i32) {
    %c1_i32 = arith.constant 1 : i32
    %0 = arith.muli %arg0, %c1_i32 : i32
    %1 = arith.addi %0, %arg1 : i32
    %c0_i32 = arith.constant 0 : i32
    %2 = arith.minsi %1, %c0_i32 : i32
    %c0_i32_0 = arith.constant 0 : i32
    %c0_i32_1 = arith.constant 0 : i32
    return %2, %c0_i32_0 : i32, i32
  }
  func.func @transform_1(%arg0: i32, %arg1: i32) -> (i32, i32) {
    %c1_i32 = arith.constant 1 : i32
    %0 = arith.muli %arg0, %c1_i32 : i32
    %1 = arith.addi %0, %arg1 : i32
    %c0_i32 = arith.constant 0 : i32
    %2 = arith.minsi %1, %c0_i32 : i32
    %c0_i32_0 = arith.constant 0 : i32
    %c0_i32_1 = arith.constant 0 : i32
    return %2, %c0_i32_0 : i32, i32
  }
  func.func @transform_2(%arg0: i32, %arg1: i32) -> (i32, i32) {
    %c0_i32 = arith.constant 0 : i32
    %c0_i32_0 = arith.constant 0 : i32
    return %arg0, %c0_i32 : i32, i32
  }
}

</mosaic_0001>

<llo_original>
// kernel: _penalized_loss_impl.1
$region0: #{_penalized_loss_impl.1}
  #allocation0 [shape = 'u32[]', space=smem, size = 0x4, offset = 0x4, fixed_abs, tag = 'smem constant byte address 0x4 - core index']
  #allocation1 [shape = 'u32[144,128]{1,0:T(1,128)}', space=vmem, size = 0x12000, scoped, tag = 'internal scratch']
  #allocation2 [shape = 'f32[8,128]{1,0:T(8,128)}', space=vmem, size = 0x1000, scoped, tag = 'scratch operand']
  #allocation3 [shape = 'f32[8,128]{1,0:T(8,128)}', space=vmem, size = 0x1000, scoped, tag = 'scratch operand']
  #allocation4 [shape = 'f32[8,128]{1,0:T(8,128)}', space=vmem, size = 0x1000, scoped, tag = 'scratch operand']
  %s0 = inlined_call_operand.vmem [shape: f32[8,128], index: 0, kind: input, shape index: {}]
  %s1 = inlined_call_operand.vmem [shape: f32[8,128], index: 1, kind: input, shape index: {}]
  %s2 = inlined_call_operand.vmem [shape: f32[1,3], index: 2, kind: output, shape index: {}]
  %s3 = sld [smem:[#allocation0]]
  $region34: #{_penalized_loss_impl.1} parent=0
    _
  %s5 = ssub.s32 1, %s3
  %s6 = scalar_select 0, %s5, %s3
  $region1: #{_penalized_loss_impl.1} parent=0
    #allocation5 [shape = 'u8[512]{0}', space=smem, size = 0x200, scoped, tag = 'output window, operand 0, single buffered']
    #allocation6 [shape = 's32[1]{0}', space=sflag, size = 0x4, scoped, tag = 'scoped memory for _penalized_loss_impl.1']
    %7 = vsyncpa [#allocation6], 0
    // Predicated region
    $region2: #{_penalized_loss_impl.1} parent=1 // pred_check
      _
    $region3: #{_penalized_loss_impl.1} parent=1 // pred_check_branch
      %9 = sbr.rel (0) target = $region5
    $region4: #{_penalized_loss_impl.1} parent=1 // pred_region
      %s10 = sadd.s32 0, 0
      %p11 = scmp.lt.s32.totalorder %s10, 0
      %s12 = scalar_select %p11, %s10, 0
      %p13 = scmp.lt.s32.totalorder %s12, 0
      %s14 = scalar_select %p13, %s12, 0
      %s15 = smul.addr %s14, 8
      %s16 = scalar_lea.vmem %s0, %s15
      %s17 = sadd.s32 0, 0
      %p18 = scmp.lt.s32.totalorder %s17, 0
      %s19 = scalar_select %p18, %s17, 0
    $region5: #{_penalized_loss_impl.1} parent=1 // pred_fallthru
      _
    // Predicated region
    $region6: #{_penalized_loss_impl.1} parent=1 // pred_check
      _
    $region7: #{_penalized_loss_impl.1} parent=1 // pred_check_branch
      %21 = sbr.rel (0) target = $region9
    $region8: #{_penalized_loss_impl.1} parent=1 // pred_region
      %s22 = sadd.s32 0, 0
      %p23 = scmp.lt.s32.totalorder %s22, 0
      %s24 = scalar_select %p23, %s22, 0
      %p25 = scmp.lt.s32.totalorder %s24, 0
      %s26 = scalar_select %p25, %s24, 0
      %s27 = smul.addr %s26, 8
      %s28 = scalar_lea.vmem %s1, %s27
      %s29 = sadd.s32 0, 0
      %p30 = scmp.lt.s32.totalorder %s29, 0
      %s31 = scalar_select %p30, %s29, 0
    $region9: #{_penalized_loss_impl.1} parent=1 // pred_fallthru
      _
    %s32 = sadd.s32 0, 0
    %p33 = scmp.lt.s32.totalorder %s32, 0
    %s34 = scalar_select %p33, %s32, 0
    %p35 = scmp.lt.s32.totalorder %s34, 0
    %s36 = scalar_select %p35, %s34, 0
    %s37 = smul.addr %s36, 8
    %s38 = scalar_lea.vmem %s0, %s37
    %s39 = sadd.s32 0, 0
    %p40 = scmp.lt.s32.totalorder %s39, 0
    %s41 = scalar_select %p40, %s39, 0
    %p42 = scmp.lt.s32.totalorder %s41, 0
    %s43 = scalar_select %p42, %s41, 0
    %s44 = smul.addr %s43, 8
    %s45 = scalar_lea.vmem %s1, %s44
    %s46 = sadd.s32 0, 0
    %p47 = scmp.lt.s32.totalorder %s46, 0
    %s48 = scalar_select %p47, %s46, 0
    %p49 = scmp.lt.s32.totalorder %s48, 0
    %s50 = scalar_select %p49, %s48, 0
    %s51 = smul.addr %s50, 8
    %s52 = scalar_lea.vmem %s0, %s51
    %s53 = sadd.s32 0, 0
    %p54 = scmp.lt.s32.totalorder %s53, 0
    %s55 = scalar_select %p54, %s53, 0
    %s56 = sadd.s32 0, 0
    %p57 = scmp.lt.s32.totalorder %s56, 0
    %s58 = scalar_select %p57, %s56, 0
    %p59 = scmp.lt.s32.totalorder %s58, 0
    %s60 = scalar_select %p59, %s58, 0
    %s61 = smul.addr %s60, 8
    %s62 = scalar_lea.vmem %s1, %s61
    %s63 = sadd.s32 0, 0
    %p64 = scmp.lt.s32.totalorder %s63, 0
    %s65 = scalar_select %p64, %s63, 0
    %p66 = scmp.eq.s32.totalorder 0, 0
    // Predicated region
    $region10: #{_penalized_loss_impl.1} parent=1 // pred_check
      %p67 = pneg %p66
    $region11: #{_penalized_loss_impl.1} parent=1 // pred_check_branch
      %69 = sbr.rel (%p67) target = $region13
    $region12: #{_penalized_loss_impl.1} parent=1 // pred_region
      %70 = vst [vmem:[#allocation2] sm:$0xff] 0.0
      %71 = vst [vmem:[#allocation3] sm:$0xff] 0.0
      %72 = vst [vmem:[#allocation4] sm:$0xff] 0.0
    $region13: #{_penalized_loss_impl.1} parent=1 // pred_fallthru
      _
    %s73 = sadd.s32 0, 0
    %s74 = smul.u32 %s73, 8
    %s75 = ssub.s32 8, %s74
    %v76 = vld [vmem:[%s52] sm:$0xff]
    %v77 = vld [vmem:[%s62] sm:$0xff]
    %v78 = vsub.f32 %v76, %v77
    %v79 = vand.u32 2147483647, %v78
    %vm80 = vcmp.lt.f32.partialorder %v76, %v77
    %p81 = scmp.ge.s32.totalorder %s75, 8
    // Predicated region
    $region14: #{_penalized_loss_impl.1} parent=1 // pred_check
      %p82 = pneg %p81
    $region15: #{_penalized_loss_impl.1} parent=1 // pred_check_branch
      %84 = sbr.rel (%p82) target = $region17
    $region16: #{_penalized_loss_impl.1} parent=1 // pred_region
      %v85 = vld [vmem:[#allocation2] sm:$0xff]
      %v86 = vadd.f32 %v85, %v79
      %87 = vst [vmem:[#allocation2] sm:$0xff] %v86
      %v88 = vld [vmem:[#allocation3] sm:$0xff]
      %v89 = vsel %vm80, %v79, 0.0
      %v90 = vadd.f32 %v88, %v89
      %91 = vst [vmem:[#allocation3] sm:$0xff] %v90
      %v92 = vld [vmem:[#allocation4] sm:$0xff]
      %v93 = vsel %vm80, 1.0, 0.0
      %v94 = vadd.f32 %v92, %v93
      %95 = vst [vmem:[#allocation4] sm:$0xff] %v94
    $region17: #{_penalized_loss_impl.1} parent=1 // pred_fallthru
      _
    %p96 = scmp.lt.s32.totalorder %s75, 8
    // Predicated region
    $region18: #{_penalized_loss_impl.1} parent=1 // pred_check
      %p97 = pneg %p96
    $region19: #{_penalized_loss_impl.1} parent=1 // pred_check_branch
      %99 = sbr.rel (%p97) target = $region21
    $region20: #{_penalized_loss_impl.1} parent=1 // pred_region
      %v100 = vlaneseq
      %v101 = vshrl.u32 %v100, 7
      %v102 = vstv %s75
      %vm103 = vcmp.lt.s32.totalorder %v101, %v102
      %vm104 = vmand %vm103, %vm80
      %v105 = vld [vmem:[#allocation2] sm:$0xff]
      %v106 = vsel %vm103, %v79, 0.0
      %v107 = vadd.f32 %v105, %v106
      %108 = vst [vmem:[#allocation2] sm:$0xff] %v107
      %v109 = vld [vmem:[#allocation3] sm:$0xff]
      %v110 = vsel %vm104, %v79, 0.0
      %v111 = vadd.f32 %v109, %v110
      %112 = vst [vmem:[#allocation3] sm:$0xff] %v111
      %v113 = vld [vmem:[#allocation4] sm:$0xff]
      %v114 = vsel %vm104, 1.0, 0.0
      %v115 = vadd.f32 %v113, %v114
      %116 = vst [vmem:[#allocation4] sm:$0xff] %v115
    $region21: #{_penalized_loss_impl.1} parent=1 // pred_fallthru
      _
    // Predicated region
    $region22: #{_penalized_loss_impl.1} parent=1 // pred_check
      %p117 = pneg %p66
    $region23: #{_penalized_loss_impl.1} parent=1 // pred_check_branch
      %119 = sbr.rel (%p117) target = $region25
    $region24: #{_penalized_loss_impl.1} parent=1 // pred_region
      %v120 = vld [vmem:[#allocation2] sm:$0xff]
      %121 = vadd.xlane.f32.xlu0 %v120
      %v122 = vpop.xlane.xlu0 %121
      %v123 = vrot.slane %v122, 4
      %v124 = vadd.f32 %v122, %v123
      %v125 = vrot.slane %v124, 2
      %v126 = vadd.f32 %v124, %v125
      %v127 = vrot.slane %v126, 1
      %v128 = vadd.f32 %v126, %v127
      %s129 = vtos %v128
      %s130 = scalar_lea.smem [#allocation5], 0
      %131 = sst [smem:[%s130]] %s129
      %v132 = vld [vmem:[#allocation3] sm:$0xff]
      %133 = vadd.xlane.f32.xlu0 %v132
      %v134 = vpop.xlane.xlu0 %133
      %v135 = vrot.slane %v134, 4
      %v136 = vadd.f32 %v134, %v135
      %v137 = vrot.slane %v136, 2
      %v138 = vadd.f32 %v136, %v137
      %v139 = vrot.slane %v138, 1
      %v140 = vadd.f32 %v138, %v139
      %s141 = vtos %v140
      %s142 = scalar_lea.smem [#allocation5], 1
      %143 = sst [smem:[%s142]] %s141
      %v144 = vld [vmem:[#allocation4] sm:$0xff]
      %145 = vadd.xlane.f32.xlu0 %v144
      %v146 = vpop.xlane.xlu0 %145
      %v147 = vrot.slane %v146, 4
      %v148 = vadd.f32 %v146, %v147
      %v149 = vrot.slane %v148, 2
      %v150 = vadd.f32 %v148, %v149
      %v151 = vrot.slane %v150, 1
      %v152 = vadd.f32 %v150, %v151
      %s153 = vtos %v152
      %s154 = scalar_lea.smem [#allocation5], 2
      %155 = sst [smem:[%s154]] %s153
    $region25: #{_penalized_loss_impl.1} parent=1 // pred_fallthru
      _
    // Predicated region
    $region26: #{_penalized_loss_impl.1} parent=1 // pred_check
      _
    $region27: #{_penalized_loss_impl.1} parent=1 // pred_check_branch
      %157 = sbr.rel (0) target = $region29
    $region28: #{_penalized_loss_impl.1} parent=1 // pred_region
      %s159 = ssub.s32 16, 16
      %160 = vsyncadd [#allocation6], %s159
      %s162 = sshll.u32 %s2, 4
      %s163 = int_to_ptr.vmem [resolvable:$true] %s162
      %165 = dma.smem_to_vmem [#allocation5], 16, %s163, [#allocation6]
    $region29: #{_penalized_loss_impl.1} parent=1 // pred_fallthru
      _
    // Predicated region
    $region30: #{_penalized_loss_impl.1} parent=1 // pred_check
      _
    $region31: #{_penalized_loss_impl.1} parent=1 // pred_check_branch
      %167 = sbr.rel (0) target = $region33
    $region32: #{_penalized_loss_impl.1} parent=1 // pred_region
      %168 = dma.done [#allocation6], 16
    $region33: #{_penalized_loss_impl.1} parent=1 // pred_fallthru
      _
    %169 = sfence
    %170 = vsyncpa [#allocation6], 1

</llo_original>
